<compile_context>
chip_gen: v6e
topology: v6e:2x2x1
jax: 0.10.0
libtpu: 0.0.40
codegen_flags: <defaults>
</compile_context>

<pallas_src>
import math

import jax
import jax.numpy as jnp
import numpy as np
from jax.experimental import pallas as pl
from jax.experimental.pallas import tpu as pltpu


# ----------------------------------------------------------------------------
# Pallas kernel: LayerNorm -> modulate -> Linear   (one token tile x cout tile)
# ----------------------------------------------------------------------------
def _lwm_kernel(x_ref, scale1_ref, shift_ref, lin_w_ref, lin_b_ref, o_ref):
    # x:      (block_n, Cin)  f32
    # scale1: (1, Cin)        f32   == 1 + scale  (precomputed in wrapper)
    # shift:  (1, Cin)        f32
    # lin_w:  (Cin, block_cout) bf16
    # lin_b:  (1, block_cout)   f32
    x = x_ref[...].astype(jnp.float32)

    # LayerNorm (no affine, eps = 1e-6)
    mu = jnp.mean(x, axis=-1, keepdims=True)
    var = jnp.mean(jnp.square(x - mu), axis=-1, keepdims=True)
    xn = (x - mu) * jax.lax.rsqrt(var + 1e-6)

    # modulate (broadcast over tokens) + output linear (MXU, f32 accumulation)
    xm = scale1_ref[...] * xn + shift_ref[...]
    out = jnp.dot(xm.astype(jnp.bfloat16), lin_w_ref[...],
                  preferred_element_type=jnp.float32) + lin_b_ref[...]
    o_ref[...] = out.astype(o_ref.dtype)


# ----------------------------------------------------------------------------
# tiling heuristics
# ----------------------------------------------------------------------------
_VMEM_BUDGET = 48 * 1024 * 1024      # leave headroom under v7x's 64 MiB VMEM


def _pick_block_cout(cin, cout):
    """Tile Cout only if bf16 lin_w would blow the VMEM budget."""
    if cin * cout * 2 <= _VMEM_BUDGET // 2:
        return cout
    for b in (2048, 1024, 512, 256, 128):
        if cout % b == 0 and cin * b * 2 <= _VMEM_BUDGET // 2:
            return b
    return min(cout, 128)


def _pick_block_n(n, cin, block_cout, weight_bytes):
    """Largest row tile (mult. of 8) dividing n that fits the VMEM budget."""
    for b in (1024, 512, 256, 128, 64, 32, 16, 8):
        if n % b == 0 and b <= n:
            act = 2 * (b * cin * 4 + b * block_cout * 4)   # dbl-buffered x + out
            if act + weight_bytes <= _VMEM_BUDGET:
                return b
    return n


# ----------------------------------------------------------------------------
# wrapper
# ----------------------------------------------------------------------------
def linear_with_modulation(x, y, params, *, block_n=None, block_cout=None):
    """x: (B, N, Cin), y: (B, 1, Cin) -> (B, N, Cout)."""
    B, N, Cin = x.shape
    Cout = params["lin_w"].shape[1]

    # --- hoisted modulation path: scale/shift once per batch (plain XLA) ----
    silu_y = y * jax.nn.sigmoid(y)                                   # (B,1,Cin)
    mod = jnp.dot(silu_y.astype(jnp.bfloat16),
                  params["mod_w"].astype(jnp.bfloat16),
                  preferred_element_type=jnp.float32)
    mod = mod + params["mod_b"].astype(jnp.float32)
    scale1 = (1.0 + mod[..., :Cin]).astype(jnp.float32)              # (B,1,Cin)
    shift = mod[..., Cin:].astype(jnp.float32)                       # (B,1,Cin)

    # --- main linear: bf16 weights, f32 bias ---------------------------------
    lin_w = params["lin_w"].astype(jnp.bfloat16)                     # (Cin, Cout)
    lin_b = params["lin_b"].reshape(1, -1).astype(jnp.float32)       # (1, Cout)

    block_cout = block_cout or _pick_block_cout(Cin, Cout)
    assert Cout % block_cout == 0
    n_c = Cout // block_cout
    w_bytes = Cin * block_cout * 2 * (1 if n_c == 1 else 2)
    block_n = block_n or _pick_block_n(N, Cin, block_cout, w_bytes)
    assert N % block_n == 0

    # constant-index blocks get single-buffering; tiled weights keep default 2
    w_mode = pl.Buffered(1) if n_c == 1 else pl.Buffered(2)

    return pl.pallas_call(
        _lwm_kernel,
        out_shape=jax.ShapeDtypeStruct((B, N, Cout), x.dtype),
        grid=(B, N // block_n, n_c),
        in_specs=[
            # x tile: constant over the (innermost) cout axis -> not re-DMA'd
            pl.BlockSpec((None, block_n, Cin), lambda b, j, c: (b, j, 0)),
            pl.BlockSpec((None, 1, Cin), lambda b, j, c: (b, 0, 0)),   # 1+scale
            pl.BlockSpec((None, 1, Cin), lambda b, j, c: (b, 0, 0)),   # shift
            pl.BlockSpec((Cin, block_cout), lambda b, j, c: (0, c),
                         pipeline_mode=w_mode),                         # lin_w
            pl.BlockSpec((1, block_cout), lambda b, j, c: (0, c),
                         pipeline_mode=w_mode),                         # lin_b
        ],
        out_specs=pl.BlockSpec((None, block_n, block_cout),
                               lambda b, j, c: (b, j, c)),
        compiler_params=pltpu.CompilerParams(
            dimension_semantics=("parallel", "parallel", "arbitrary"),
            vmem_limit_bytes=64 * 1024 * 1024,
        ),
    )(x, scale1, shift, lin_w, lin_b)


# ----------------------------------------------------------------------------
# parameters (weights stored as (in, out) == transpose of PyTorch Linear)
# ----------------------------------------------------------------------------
def init_params(key, cin, cout):
    k1, k2, k3, k4 = jax.random.split(key, 4)
    return dict(
        mod_w=jax.random.normal(k1, (cin, 2 * cin), jnp.float32) / math.sqrt(cin),
        mod_b=jax.random.normal(k2, (2 * cin,), jnp.float32) * 0.02,
        lin_w=jax.random.normal(k3, (cin, cout), jnp.float32) / math.sqrt(cin),
        lin_b=jax.random.normal(k4, (cout,), jnp.float32) * 0.02,
    )


# ----------------------------------------------------------------------------
# pure-JAX reference (same math, same bf16-in / f32-acc mixed precision)
# ----------------------------------------------------------------------------
def _mm(a, w):
    return jnp.dot(a.astype(jnp.bfloat16), w.astype(jnp.bfloat16),
                   preferred_element_type=jnp.float32)


def linear_with_modulation_ref(x, y, params):
    silu_y = y * jax.nn.sigmoid(y)
    mod = _mm(silu_y, params["mod_w"]) + params["mod_b"]
    scale, shift = jnp.split(mod, 2, axis=-1)
    mu = jnp.mean(x, axis=-1, keepdims=True)
    var = jnp.mean(jnp.square(x - mu), axis=-1, keepdims=True)
    xn = (x - mu) * jax.lax.rsqrt(var + 1e-6)
    xm = (1.0 + scale) * xn + shift
    return _mm(xm, params["lin_w"]) + params["lin_b"]


# ----------------------------------------------------------------------------
if __name__ == "__main__":
    key = jax.random.PRNGKey(0)
    # small but MXU-friendly shapes (Cin/Cout multiples of 128, lane-dense out)
    B, N, Cin, Cout = 2, 256, 128, 256

    kx, ky, kp = jax.random.split(key, 3)
    x = jax.random.normal(kx, (B, N, Cin), jnp.float32)
    y = jax.random.normal(ky, (B, 1, Cin), jnp.float32)   # per-sample conditioning
    params = init_params(kp, Cin, Cout)

    out = linear_with_modulation(x, y, params)
    out = jax.block_until_ready(out)

    ref = linear_with_modulation_ref(x, y, params)
    np.testing.assert_allclose(np.asarray(out), np.asarray(ref), rtol=1e-2, atol=1e-2)
    assert out.shape == (B, N, Cout)

    print("KERNEL_OK")
</pallas_src>

<mosaic_0001>
module attributes {stable_mosaic.version = 11 : i64} {
  func.func @_lwm_kernel(%arg0: i32, %arg1: i32, %arg2: i32, %arg3: memref<1x256x128xf32, #tpu.memory_space<vmem>>, %arg4: memref<1x1x128xf32, #tpu.memory_space<vmem>>, %arg5: memref<1x1x128xf32, #tpu.memory_space<vmem>>, %arg6: memref<128x256xbf16, #tpu.memory_space<vmem>>, %arg7: memref<1x256xf32, #tpu.memory_space<vmem>>, %arg8: memref<1x256x256xf32, #tpu.memory_space<vmem>>) attributes {dimension_semantics = [#tpu.dimension_semantics<parallel>, #tpu.dimension_semantics<parallel>, #tpu.dimension_semantics<arbitrary>], iteration_bounds = array<i64: 2, 1, 1>, scalar_prefetch = 0 : i64, scratch_operands = 0 : i64, tpu.core_type = #tpu.core_type<tc>, window_params = [{transform_indices = @transform_0, window_bounds = array<i64: 1, 256, 128>}, {transform_indices = @transform_1, window_bounds = array<i64: 1, 1, 128>}, {transform_indices = @transform_2, window_bounds = array<i64: 1, 1, 128>}, {pipeline_mode = #tpu.pipeline_mode<synchronous>, transform_indices = @transform_3, window_bounds = array<i64: 128, 256>}, {pipeline_mode = #tpu.pipeline_mode<synchronous>, transform_indices = @transform_4, window_bounds = array<i64: 1, 256>}, {transform_indices = @transform_5, window_bounds = array<i64: 1, 256, 256>}]} {
    %c0 = arith.constant 0 : index
    %c0_0 = arith.constant 0 : index
    %c0_1 = arith.constant 0 : index
    %0 = vector.load %arg3[%c0, %c0_0, %c0_1] : memref<1x256x128xf32, #tpu.memory_space<vmem>>, vector<1x256x128xf32>
    %1 = vector.shape_cast %0 : vector<1x256x128xf32> to vector<256x128xf32>
    %cst = arith.constant dense<0.000000e+00> : vector<256xf32>
    %2 = vector.multi_reduction <add>, %1, %cst [1] : vector<256x128xf32> to vector<256xf32>
    %3 = vector.shape_cast %2 : vector<256xf32> to vector<256x1xf32>
    %cst_2 = arith.constant 1.280000e+02 : f32
    %4 = vector.broadcast %cst_2 : f32 to vector<256x1xf32>
    %5 = arith.divf %3, %4 : vector<256x1xf32>
    %6 = vector.broadcast %5 : vector<256x1xf32> to vector<256x128xf32>
    %7 = arith.subf %1, %6 : vector<256x128xf32>
    %8 = arith.mulf %7, %7 : vector<256x128xf32>
    %cst_3 = arith.constant dense<0.000000e+00> : vector<256xf32>
    %9 = vector.multi_reduction <add>, %8, %cst_3 [1] : vector<256x128xf32> to vector<256xf32>
    %10 = vector.shape_cast %9 : vector<256xf32> to vector<256x1xf32>
    %cst_4 = arith.constant 1.280000e+02 : f32
    %11 = vector.broadcast %cst_4 : f32 to vector<256x1xf32>
    %12 = arith.divf %10, %11 : vector<256x1xf32>
    %13 = vector.broadcast %5 : vector<256x1xf32> to vector<256x128xf32>
    %14 = arith.subf %1, %13 : vector<256x128xf32>
    %cst_5 = arith.constant 9.99999997E-7 : f32
    %15 = vector.broadcast %cst_5 : f32 to vector<256x1xf32>
    %16 = arith.addf %12, %15 : vector<256x1xf32>
    %17 = math.rsqrt %16 : vector<256x1xf32>
    %18 = vector.broadcast %17 : vector<256x1xf32> to vector<256x128xf32>
    %19 = arith.mulf %14, %18 : vector<256x128xf32>
    %c0_6 = arith.constant 0 : index
    %c0_7 = arith.constant 0 : index
    %c0_8 = arith.constant 0 : index
    %20 = vector.load %arg4[%c0_6, %c0_7, %c0_8] : memref<1x1x128xf32, #tpu.memory_space<vmem>>, vector<1x1x128xf32>
    %21 = vector.shape_cast %20 : vector<1x1x128xf32> to vector<1x128xf32>
    %22 = vector.broadcast %21 : vector<1x128xf32> to vector<256x128xf32>
    %23 = arith.mulf %22, %19 : vector<256x128xf32>
    %c0_9 = arith.constant 0 : index
    %c0_10 = arith.constant 0 : index
    %c0_11 = arith.constant 0 : index
    %24 = vector.load %arg5[%c0_9, %c0_10, %c0_11] : memref<1x1x128xf32, #tpu.memory_space<vmem>>, vector<1x1x128xf32>
    %25 = vector.shape_cast %24 : vector<1x1x128xf32> to vector<1x128xf32>
    %26 = vector.broadcast %25 : vector<1x128xf32> to vector<256x128xf32>
    %27 = arith.addf %23, %26 : vector<256x128xf32>
    %28 = arith.truncf %27 : vector<256x128xf32> to vector<256x128xbf16>
    %c0_12 = arith.constant 0 : index
    %c0_13 = arith.constant 0 : index
    %29 = vector.load %arg6[%c0_12, %c0_13] : memref<128x256xbf16, #tpu.memory_space<vmem>>, vector<128x256xbf16>
    %cst_14 = arith.constant dense<0.000000e+00> : vector<256x256xf32>
    %30 = tpu.matmul %28, %29, %cst_14 {dimension_numbers = #tpu.dot_dimension_numbers<[1], [0], [0], [1], [0, 0, 1, 1], [], []>} : vector<256x128xbf16>, vector<128x256xbf16>, vector<256x256xf32> -> vector<256x256xf32>
    %c0_15 = arith.constant 0 : index
    %c0_16 = arith.constant 0 : index
    %31 = vector.load %arg7[%c0_15, %c0_16] : memref<1x256xf32, #tpu.memory_space<vmem>>, vector<1x256xf32>
    %32 = vector.broadcast %31 : vector<1x256xf32> to vector<256x256xf32>
    %33 = arith.addf %30, %32 : vector<256x256xf32>
    %c0_17 = arith.constant 0 : index
    %c0_18 = arith.constant 0 : index
    %c0_19 = arith.constant 0 : index
    %34 = vector.load %arg8[%c0_17, %c0_18, %c0_19] : memref<1x256x256xf32, #tpu.memory_space<vmem>>, vector<1x256x256xf32>
    %35 = vector.shape_cast %34 : vector<1x256x256xf32> to vector<256x256xf32>
    %36 = vector.shape_cast %33 : vector<256x256xf32> to vector<1x256x256xf32>
    tpu.vector_store %arg8[%c0_17, %c0_18, %c0_19], %36 {strides = array<i32>} : memref<1x256x256xf32, #tpu.memory_space<vmem>>, vector<1x256x256xf32>,
    return
  }
  func.func @transform_0(%arg0: i32, %arg1: i32, %arg2: i32) -> (i32, i32, i32) {
    %c0_i32 = arith.constant 0 : i32
    %c0_i32_0 = arith.constant 0 : i32
    return %arg0, %arg1, %c0_i32 : i32, i32, i32
  }
  func.func @transform_1(%arg0: i32, %arg1: i32, %arg2: i32) -> (i32, i32, i32) {
    %c0_i32 = arith.constant 0 : i32
    %c0_i32_0 = arith.constant 0 : i32
    %c0_i32_1 = arith.constant 0 : i32
    return %arg0, %c0_i32, %c0_i32_0 : i32, i32, i32
  }
  func.func @transform_2(%arg0: i32, %arg1: i32, %arg2: i32) -> (i32, i32, i32) {
    %c0_i32 = arith.constant 0 : i32
    %c0_i32_0 = arith.constant 0 : i32
    %c0_i32_1 = arith.constant 0 : i32
    return %arg0, %c0_i32, %c0_i32_0 : i32, i32, i32
  }
  func.func @transform_3(%arg0: i32, %arg1: i32, %arg2: i32) -> (i32, i32) {
    %c0_i32 = arith.constant 0 : i32
    %c0_i32_0 = arith.constant 0 : i32
    return %c0_i32, %arg2 : i32, i32
  }
  func.func @transform_4(%arg0: i32, %arg1: i32, %arg2: i32) -> (i32, i32) {
    %c0_i32 = arith.constant 0 : i32
    %c0_i32_0 = arith.constant 0 : i32
    return %c0_i32, %arg2 : i32, i32
  }
  func.func @transform_5(%arg0: i32, %arg1: i32, %arg2: i32) -> (i32, i32, i32) {
    %c0_i32 = arith.constant 0 : i32
    return %arg0, %arg1, %arg2 : i32, i32, i32
  }
}

</mosaic_0001>

<llo_original>
// kernel: tpu_custom_call.1
$region0: #{tpu_custom_call.1}
  #allocation0 [shape = 'u32[]', space=smem, size = 0x4, offset = 0x4, fixed_abs, tag = 'smem constant byte address 0x4 - core index']
  #allocation1 [shape = 'u32[144,128]{1,0:T(1,128)}', space=vmem, size = 0x12000, scoped, tag = 'internal scratch']
  %s0 = inlined_call_operand.hbm [shape: f32[2,256,128], index: 0, kind: input, shape index: {}]
  %s1 = inlined_call_operand.hbm [shape: f32[2,1,128], index: 1, kind: input, shape index: {}]
  %s2 = inlined_call_operand.vmem [shape: f32[2,1,128], index: 2, kind: input, shape index: {}]
  %s3 = inlined_call_operand.hbm [shape: bf16[128,256], index: 3, kind: input, shape index: {}]
  %s4 = inlined_call_operand.vmem [shape: f32[1,256], index: 4, kind: input, shape index: {}]
  %s5 = inlined_call_operand.hbm [shape: f32[2,256,256], index: 5, kind: output, shape index: {}]
  %s6 = sld [smem:[#allocation0]]
  $region65: #{tpu_custom_call.1} parent=0
    _
  %s8 = ssub.s32 1, %s6
  %s9 = scalar_select 0, %s8, %s6
  $region1: #{tpu_custom_call.1} parent=0
    #allocation2 [shape = 'u8[262144]{0}', space=vmem, size = 0x40000, scoped, tag = 'input window, operand 0']
    #allocation3 [shape = 's32[2]{0}', space=sflag, size = 0x8, scoped, tag = 'scoped memory for tpu_custom_call.1']
    #allocation4 [shape = 's32[2]{0}', space=sflag, size = 0x8, scoped, tag = 'scoped memory for tpu_custom_call.1']
    #allocation5 [shape = 'u8[1024]{0}', space=vmem, size = 0x400, scoped, tag = 'input window, operand 1']
    #allocation6 [shape = 's32[2]{0}', space=sflag, size = 0x8, scoped, tag = 'scoped memory for tpu_custom_call.1']
    #allocation7 [shape = 'u8[65536]{0}', space=vmem, size = 0x10000, scoped, tag = 'input window, operand 3, single buffered']
    #allocation8 [shape = 'u8[524288]{0}', space=vmem, size = 0x80000, scoped, tag = 'output window, operand 0']
    %10 = vsyncpa [#allocation3], 0
    %s11 = scalar_lea.sflag [#allocation3], 1
    %12 = vsyncpa %s11, 0
    %13 = vsyncpa [#allocation6], 0
    %s14 = scalar_lea.sflag [#allocation6], 1
    %15 = vsyncpa %s14, 0
    %16 = vsyncpa [#allocation4], 0
    %s17 = scalar_lea.sflag [#allocation4], 1
    %18 = vsyncpa %s17, 0
    loop: start=0, step=1, limit=4
    $region2: #{tpu_custom_call.1} parent=1 // loop_pre_header
      _
    $region3: #{tpu_custom_call.1} parent=1 // loop_header
      %s20 = sphi 0, %s24
      %p21 = scmp.ge.s32.totalorder %s20, 4
      %s27 = sphi 0, %s46
      %s28 = sphi 0, %s42
      %s29 = sphi 0, %s38
      %s30 = sphi 0, %s27
      %s31 = sphi 0, %s28
      %s32 = sphi 0, %s29
      %s33 = sphi 0, %s30
      %s34 = sphi 0, %s31
      %s35 = sphi 0, %s32
      %s51 = sphi 0, %s53
      %s54 = sphi 0, %s51
      %s55 = sphi 0, %s54
      %s71 = sphi 0, %s55
      %s77 = sphi 0, %s79
      %s80 = sphi 0, %s77
      %s81 = sphi 0, %s80
      %s97 = sphi 0, %s81
      %s103 = sphi 0, %s105
      %s106 = sphi 0, %s103
      %s107 = sphi 0, %s106
      %s123 = sphi 0, %s107
      %s129 = sphi 0, %s131
      %s132 = sphi 0, %s129
      %s133 = sphi 0, %s132
      %s149 = sphi 0, %s133
      %s155 = sphi 0, %s157
      %s158 = sphi 0, %s155
      %s159 = sphi 0, %s158
      %s175 = sphi 0, %s159
      %s185 = sphi 0, %s187
      %s188 = sphi 0, %s185
      %s189 = sphi 0, %s188
      %s205 = sphi 0, %s189
    $region4: #{tpu_custom_call.1} parent=1 // loop_header_branch
      %23 = sbr.rel (%p21) target = $region8
    $region5: #{tpu_custom_call.1} parent=1 // loop_body
      %s25 = ssub.s32 %s20, 1
      %s26 = ssub.s32 %s20, 2
      %s36 = sadd.s32 1, %s29
      %p37 = scmp.ge.s32.totalorder %s36, 1
      %s38 = scalar_select %p37, 0, %s36
      %s39 = sadd.s32 1, %s28
      %s40 = scalar_select %p37, %s39, %s28
      %p41 = scmp.ge.s32.totalorder %s40, 1
      %s42 = scalar_select %p41, 0, %s40
      %s43 = sadd.s32 1, %s27
      %s44 = scalar_select %p41, %s43, %s27
      %p45 = scmp.ge.s32.totalorder %s44, 2
      %s46 = scalar_select %p45, 0, %s44
      %s47 = ssub.s32 %s27, %s46
      %s48 = ssub.s32 %s28, %s42
      %s49 = sor.u32 %s47, %s48
      %p50 = scmp.eq.s32.totalorder %s49, 0
      %s52 = sadd.s32 %s51, 1
      %s53 = scalar_select %p50, %s51, %s52
      %p56 = pneg %p50
      %p57 = scmp.eq.s32.totalorder %s20, 1
      %p58 = por %p56, %p57
      %p59 = scmp.ne.s32.totalorder %s51, %s54
      %p60 = scmp.eq.s32.totalorder %s20, 0
      %p61 = por %p59, %p60
      %p62 = scmp.ne.s32.totalorder %s51, %s54
      %p63 = scmp.eq.s32.totalorder %s25, 1
      %p64 = por %p62, %p63
      %p65 = scmp.ne.s32.totalorder %s54, %s55
      %p66 = scmp.eq.s32.totalorder %s25, 0
      %p67 = por %p65, %p66
      %p68 = scmp.ne.s32.totalorder %s54, %s55
      %p69 = scmp.eq.s32.totalorder %s26, 1
      %p70 = por %p68, %p69
      %p72 = scmp.ne.s32.totalorder %s55, %s71
      %p73 = scmp.eq.s32.totalorder %s26, 0
      %p74 = por %p72, %p73
      %s75 = ssub.s32 %s27, %s46
      %p76 = scmp.eq.s32.totalorder %s75, 0
      %s78 = sadd.s32 %s77, 1
      %s79 = scalar_select %p76, %s77, %s78
      %p82 = pneg %p76
      %p83 = scmp.eq.s32.totalorder %s20, 1
      %p84 = por %p82, %p83
      %p85 = scmp.ne.s32.totalorder %s77, %s80
      %p86 = scmp.eq.s32.totalorder %s20, 0
      %p87 = por %p85, %p86
      %p88 = scmp.ne.s32.totalorder %s77, %s80
      %p89 = scmp.eq.s32.totalorder %s25, 1
      %p90 = por %p88, %p89
      %p91 = scmp.ne.s32.totalorder %s80, %s81
      %p92 = scmp.eq.s32.totalorder %s25, 0
      %p93 = por %p91, %p92
      %p94 = scmp.ne.s32.totalorder %s80, %s81
      %p95 = scmp.eq.s32.totalorder %s26, 1
      %p96 = por %p94, %p95
      %p98 = scmp.ne.s32.totalorder %s81, %s97
      %p99 = scmp.eq.s32.totalorder %s26, 0
      %p100 = por %p98, %p99
      %s101 = ssub.s32 %s27, %s46
      %p102 = scmp.eq.s32.totalorder %s101, 0
      %s104 = sadd.s32 %s103, 1
      %s105 = scalar_select %p102, %s103, %s104
      %p108 = pneg %p102
      %p109 = scmp.eq.s32.totalorder %s20, 1
      %p110 = por %p108, %p109
      %p111 = scmp.ne.s32.totalorder %s103, %s106
      %p112 = scmp.eq.s32.totalorder %s20, 0
      %p113 = por %p111, %p112
      %p114 = scmp.ne.s32.totalorder %s103, %s106
      %p115 = scmp.eq.s32.totalorder %s25, 1
      %p116 = por %p114, %p115
      %p117 = scmp.ne.s32.totalorder %s106, %s107
      %p118 = scmp.eq.s32.totalorder %s25, 0
      %p119 = por %p117, %p118
      %p120 = scmp.ne.s32.totalorder %s106, %s107
      %p121 = scmp.eq.s32.totalorder %s26, 1
      %p122 = por %p120, %p121
      %p124 = scmp.ne.s32.totalorder %s107, %s123
      %p125 = scmp.eq.s32.totalorder %s26, 0
      %p126 = por %p124, %p125
      %s127 = ssub.s32 %s29, %s38
      %p128 = scmp.eq.s32.totalorder %s127, 0
      %s130 = sadd.s32 %s129, 1
      %s131 = scalar_select %p128, %s129, %s130
      %p134 = pneg %p128
      %p135 = scmp.eq.s32.totalorder %s20, 1
      %p136 = por %p134, %p135
      %p137 = scmp.ne.s32.totalorder %s129, %s132
      %p138 = scmp.eq.s32.totalorder %s20, 0
      %p139 = por %p137, %p138
      %p140 = scmp.ne.s32.totalorder %s129, %s132
      %p141 = scmp.eq.s32.totalorder %s25, 1
      %p142 = por %p140, %p141
      %p143 = scmp.ne.s32.totalorder %s132, %s133
      %p144 = scmp.eq.s32.totalorder %s25, 0
      %p145 = por %p143, %p144
      %p146 = scmp.ne.s32.totalorder %s132, %s133
      %p147 = scmp.eq.s32.totalorder %s26, 1
      %p148 = por %p146, %p147
      %p150 = scmp.ne.s32.totalorder %s133, %s149
      %p151 = scmp.eq.s32.totalorder %s26, 0
      %p152 = por %p150, %p151
      %s153 = ssub.s32 %s29, %s38
      %p154 = scmp.eq.s32.totalorder %s153, 0
      %s156 = sadd.s32 %s155, 1
      %s157 = scalar_select %p154, %s155, %s156
      %p160 = pneg %p154
      %p161 = scmp.eq.s32.totalorder %s20, 1
      %p162 = por %p160, %p161
      %p163 = scmp.ne.s32.totalorder %s155, %s158
      %p164 = scmp.eq.s32.totalorder %s20, 0
      %p165 = por %p163, %p164
      %p166 = scmp.ne.s32.totalorder %s155, %s158
      %p167 = scmp.eq.s32.totalorder %s25, 1
      %p168 = por %p166, %p167
      %p169 = scmp.ne.s32.totalorder %s158, %s159
      %p170 = scmp.eq.s32.totalorder %s25, 0
      %p171 = por %p169, %p170
      %p172 = scmp.ne.s32.totalorder %s158, %s159
      %p173 = scmp.eq.s32.totalorder %s26, 1
      %p174 = por %p172, %p173
      %p176 = scmp.ne.s32.totalorder %s159, %s175
      %p177 = scmp.eq.s32.totalorder %s26, 0
      %p178 = por %p176, %p177
      %s179 = ssub.s32 %s27, %s46
      %s180 = ssub.s32 %s28, %s42
      %s181 = sor.u32 %s179, %s180
      %s182 = ssub.s32 %s29, %s38
      %s183 = sor.u32 %s181, %s182
      %p184 = scmp.eq.s32.totalorder %s183, 0
      %s186 = sadd.s32 %s185, 1
      %s187 = scalar_select %p184, %s185, %s186
      %p190 = pneg %p184
      %p191 = scmp.eq.s32.totalorder %s20, 1
      %p192 = por %p190, %p191
      %p193 = scmp.ne.s32.totalorder %s185, %s188
      %p194 = scmp.eq.s32.totalorder %s20, 0
      %p195 = por %p193, %p194
      %p196 = scmp.ne.s32.totalorder %s185, %s188
      %p197 = scmp.eq.s32.totalorder %s25, 1
      %p198 = por %p196, %p197
      %p199 = scmp.ne.s32.totalorder %s188, %s189
      %p200 = scmp.eq.s32.totalorder %s25, 0
      %p201 = por %p199, %p200
      %p202 = scmp.ne.s32.totalorder %s188, %s189
      %p203 = scmp.eq.s32.totalorder %s26, 1
      %p204 = por %p202, %p203
      %p206 = scmp.ne.s32.totalorder %s189, %s205
      %p207 = scmp.eq.s32.totalorder %s26, 0
      %p208 = por %p206, %p207
      %p209 = scmp.le.s32.totalorder 1, %s20
      %p210 = scmp.lt.s32.totalorder %s20, 3
      %p211 = pnand %p209, %p210
      %p212 = pneg %p211
      // Predicated region
      $region9: #{tpu_custom_call.1} parent=5 // pred_check
        _
      $region10: #{tpu_custom_call.1} parent=5 // pred_check_branch
        %214 = sbr.rel (%p211) target = $region12
      $region11: #{tpu_custom_call.1} parent=5 // pred_region
        %s215 = ssub.s32 %s20, 1
        // Predicated region
        $region13: #{tpu_custom_call.1} parent=11 // pred_check
          %p216 = pneg %p145
        $region14: #{tpu_custom_call.1} parent=11 // pred_check_branch
          %218 = sbr.rel (%p216) target = $region16
        $region15: #{tpu_custom_call.1} parent=11 // pred_region
          %s219 = smul.u32 2, %s32
          %s221 = ssub.s32 2048, 2048
          %222 = vsyncadd [#allocation6], %s221
          %s223 = smul.addr %s219, 64
          %s224 = scalar_lea.hbm %s3, %s223
          %s225 = sshll.u32 [#allocation7], 4
          %s226 = int_to_ptr.vmem [resolvable:$true] %s225
          %231 = dma.hbm_to_vmem [thread:$0]  %s224, 2048, %s226, [#allocation6], 128, 128, 8
        $region16: #{tpu_custom_call.1} parent=11 // pred_fallthru
          _
        // Predicated region
        $region17: #{tpu_custom_call.1} parent=11 // pred_check
          %p232 = pneg %p171
        $region18: #{tpu_custom_call.1} parent=11 // pred_check_branch
          %234 = sbr.rel (%p232) target = $region20
        $region19: #{tpu_custom_call.1} parent=11 // pred_region
          %s235 = smul.u32 2, %s32
          %p236 = scmp.lt.s32.totalorder %s235, 1
          %s237 = scalar_select %p236, %s235, 1
          %s238 = scalar_lea.vmem %s4, %s237
          %s239 = smul.u32 2, %s32
        $region20: #{tpu_custom_call.1} parent=11 // pred_fallthru
          _
      $region12: #{tpu_custom_call.1} parent=5 // pred_fallthru
        _
      %p240 = scmp.lt.s32.totalorder %s20, 2
      // Predicated region
      $region21: #{tpu_custom_call.1} parent=5 // pred_check
        %p241 = pneg %p240
      $region22: #{tpu_custom_call.1} parent=5 // pred_check_branch
        %243 = sbr.rel (%p241) target = $region24
      $region23: #{tpu_custom_call.1} parent=5 // pred_region
        // Predicated region
        $region25: #{tpu_custom_call.1} parent=23 // pred_check
          %p244 = pneg %p61
        $region26: #{tpu_custom_call.1} parent=23 // pred_check_branch
          %246 = sbr.rel (%p244) target = $region28
        $region27: #{tpu_custom_call.1} parent=23 // pred_region
          %s247 = sand.u32 %s51, 1
          %s248 = scalar_lea.sflag [#allocation3], %s247
          %s249 = sand.u32 %s51, 1
          %s250 = smul.addr %s249, 256
          %s251 = scalar_lea.vmem [#allocation2], %s250
          %s252 = smul.u32 32, %s28
          %s254 = ssub.s32 4096, 4096
          %255 = vsyncadd %s248, %s254
          %s256 = smul.addr %s27, 32
          %s257 = sadd.s32 %s252, %s256
          %s258 = smul.addr %s257, 128
          %s259 = scalar_lea.hbm %s0, %s258
          %s260 = sshll.u32 %s251, 4
          %s261 = int_to_ptr.vmem [resolvable:$true] %s260
          %266 = dma.hbm_to_vmem [thread:$0]  %s259, 4096, %s261, %s248, 128, 128, 8
        $region28: #{tpu_custom_call.1} parent=23 // pred_fallthru
          _
        // Predicated region
        $region29: #{tpu_custom_call.1} parent=23 // pred_check
          %p267 = pneg %p87
        $region30: #{tpu_custom_call.1} parent=23 // pred_check_branch
          %269 = sbr.rel (%p267) target = $region32
        $region31: #{tpu_custom_call.1} parent=23 // pred_region
          %s270 = sand.u32 %s20, 1
          %s271 = scalar_lea.sflag [#allocation6], %s270
          %s272 = sand.u32 %s77, 1
          %s273 = scalar_lea.vmem [#allocation5], %s272
          %s275 = ssub.s32 16, 16
          %276 = vsyncadd %s271, %s275
          %s277 = smul.addr %s27, 16
          %s278 = scalar_lea.hbm %s1, %s277
          %s280 = sshll.u32 %s273, 4
          %s281 = int_to_ptr.vmem [resolvable:$true] %s280
          %283 = dma.hbm_to_vmem [thread:$0]  %s278, 16, %s281, %s271
        $region32: #{tpu_custom_call.1} parent=23 // pred_fallthru
          _
        // Predicated region
        $region33: #{tpu_custom_call.1} parent=23 // pred_check
          %p284 = pneg %p113
        $region34: #{tpu_custom_call.1} parent=23 // pred_check_branch
          %286 = sbr.rel (%p284) target = $region36
        $region35: #{tpu_custom_call.1} parent=23 // pred_region
          %p287 = scmp.lt.s32.totalorder %s27, 1
          %s288 = scalar_select %p287, %s27, 1
          %s289 = scalar_lea.vmem %s2, %s288
        $region36: #{tpu_custom_call.1} parent=23 // pred_fallthru
          _
      $region24: #{tpu_custom_call.1} parent=5 // pred_fallthru
        _
      %p290 = scmp.le.s32.totalorder 1, %s20
      %p291 = scmp.lt.s32.totalorder %s20, 3
      %p292 = pnand %p290, %p291
      %p293 = pneg %p292
      // Predicated region
      $region37: #{tpu_custom_call.1} parent=5 // pred_check
        _
      $region38: #{tpu_custom_call.1} parent=5 // pred_check_branch
        %295 = sbr.rel (%p292) target = $region40
      $region39: #{tpu_custom_call.1} parent=5 // pred_region
        %s296 = ssub.s32 %s20, 1
        %s297 = sand.u32 %s54, 1
        %s298 = scalar_lea.sflag [#allocation3], %s297
        %s299 = sand.u32 %s54, 1
        %s300 = smul.addr %s299, 256
        %s301 = scalar_lea.vmem [#allocation2], %s300
        // Predicated region
        $region41: #{tpu_custom_call.1} parent=39 // pred_check
          %p302 = pneg %p67
        $region42: #{tpu_custom_call.1} parent=39 // pred_check_branch
          %304 = sbr.rel (%p302) target = $region44
        $region43: #{tpu_custom_call.1} parent=39 // pred_region
          %305 = dma.done %s298, 4096
        $region44: #{tpu_custom_call.1} parent=39 // pred_fallthru
          _
        %s306 = sand.u32 %s25, 1
        %s307 = scalar_lea.sflag [#allocation6], %s306
        %s308 = sand.u32 %s80, 1
        %s309 = scalar_lea.vmem [#allocation5], %s308
        // Predicated region
        $region45: #{tpu_custom_call.1} parent=39 // pred_check
          %p310 = pneg %p93
        $region46: #{tpu_custom_call.1} parent=39 // pred_check_branch
          %312 = sbr.rel (%p310) target = $region48
        $region47: #{tpu_custom_call.1} parent=39 // pred_region
          %313 = dma.done %s307, 16
        $region48: #{tpu_custom_call.1} parent=39 // pred_fallthru
          _
        // Predicated region
        $region49: #{tpu_custom_call.1} parent=39 // pred_check
          %p314 = pneg %p145
        $region50: #{tpu_custom_call.1} parent=39 // pred_check_branch
          %316 = sbr.rel (%p314) target = $region52
        $region51: #{tpu_custom_call.1} parent=39 // pred_region
          %317 = dma.done [#allocation6], 2048
        $region52: #{tpu_custom_call.1} parent=39 // pred_fallthru
          _
        %s318 = sand.u32 %s54, 1
        %s319 = scalar_lea.sflag [#allocation3], %s318
        %s320 = sand.u32 %s54, 1
        %s321 = smul.addr %s320, 256
        %s322 = scalar_lea.vmem [#allocation2], %s321
        %p323 = pneg %p67
        %p324 = pneg %p64
        %s325 = sand.u32 %s25, 1
        %s326 = scalar_lea.sflag [#allocation6], %s325
        %s327 = sand.u32 %s80, 1
        %s328 = scalar_lea.vmem [#allocation5], %s327
        %p329 = pneg %p93
        %p330 = pneg %p90
        %p331 = scmp.lt.s32.totalorder %s30, 1
        %s332 = scalar_select %p331, %s30, 1
        %s333 = scalar_lea.vmem %s2, %s332
        %p334 = pneg %p119
        %p335 = pneg %p116
        %p336 = pneg %p145
        %p337 = pneg %p142
        %s338 = smul.u32 2, %s32
        %p339 = scmp.lt.s32.totalorder %s338, 1
        %s340 = scalar_select %p339, %s338, 1
        %s341 = scalar_lea.vmem %s4, %s340
        %p342 = pneg %p171
        %p343 = pneg %p168
        %p344 = pneg %p201
        %p345 = pneg %p198
        %s346 = sand.u32 %s188, 1
        %s347 = scalar_lea.sflag [#allocation4], %s346
        %s348 = sand.u32 %s188, 1
        %s349 = smul.addr %s348, 512
        %s350 = scalar_lea.vmem [#allocation8], %s349
        %s351 = smul.u32 32, %s31
        %p352 = scmp.lt.s32.totalorder %s30, 1
        %s353 = scalar_select %p352, %s30, 1
        %s354 = scalar_lea.vmem %s2, %s353
        %s355 = smul.u32 2, %s32
        %s356 = smul.u32 2, %s32
        %p357 = scmp.lt.s32.totalorder %s356, 1
        %s358 = scalar_select %p357, %s356, 1
        %s359 = scalar_lea.vmem %s4, %s358
        %s360 = smul.u32 2, %s32
        %s361 = smul.u32 32, %s31
        %s362 = smul.u32 2, %s32
        %v364 = vld [vmem:[%s301] sm:$0xff]
        %v365 = vld [vmem:[%s301 + $0x8] sm:$0xff]
        %v366 = vld [vmem:[%s301 + $0x10] sm:$0xff]
        %v367 = vld [vmem:[%s301 + $0x18] sm:$0xff]
        %v368 = vld [vmem:[%s301 + $0x20] sm:$0xff]
        %v369 = vld [vmem:[%s301 + $0x28] sm:$0xff]
        %v370 = vld [vmem:[%s301 + $0x30] sm:$0xff]
        %v371 = vld [vmem:[%s301 + $0x38] sm:$0xff]
        %v372 = vld [vmem:[%s301 + $0x40] sm:$0xff]
        %v373 = vld [vmem:[%s301 + $0x48] sm:$0xff]
        %v374 = vld [vmem:[%s301 + $0x50] sm:$0xff]
        %v375 = vld [vmem:[%s301 + $0x58] sm:$0xff]
        %v376 = vld [vmem:[%s301 + $0x60] sm:$0xff]
        %v377 = vld [vmem:[%s301 + $0x68] sm:$0xff]
        %v378 = vld [vmem:[%s301 + $0x70] sm:$0xff]
        %v379 = vld [vmem:[%s301 + $0x78] sm:$0xff]
        %v380 = vld [vmem:[%s301 + $0x80] sm:$0xff]
        %v381 = vld [vmem:[%s301 + $0x88] sm:$0xff]
        %v382 = vld [vmem:[%s301 + $0x90] sm:$0xff]
        %v383 = vld [vmem:[%s301 + $0x98] sm:$0xff]
        %v384 = vld [vmem:[%s301 + $0xa0] sm:$0xff]
        %v385 = vld [vmem:[%s301 + $0xa8] sm:$0xff]
        %v386 = vld [vmem:[%s301 + $0xb0] sm:$0xff]
        %v387 = vld [vmem:[%s301 + $0xb8] sm:$0xff]
        %v388 = vld [vmem:[%s301 + $0xc0] sm:$0xff]
        %v389 = vld [vmem:[%s301 + $0xc8] sm:$0xff]
        %v390 = vld [vmem:[%s301 + $0xd0] sm:$0xff]
        %v391 = vld [vmem:[%s301 + $0xd8] sm:$0xff]
        %v392 = vld [vmem:[%s301 + $0xe0] sm:$0xff]
        %v393 = vld [vmem:[%s301 + $0xe8] sm:$0xff]
        %v394 = vld [vmem:[%s301 + $0xf0] sm:$0xff]
        %v395 = vld [vmem:[%s301 + $0xf8] sm:$0xff]
        %396 = vadd.xlane.f32.xlu0 %v364
        %v397 = vpop.xlane.xlu0 %396
        %398 = vadd.xlane.f32.xlu0 %v365
        %v399 = vpop.xlane.xlu0 %398
        %400 = vadd.xlane.f32.xlu0 %v366
        %v401 = vpop.xlane.xlu0 %400
        %402 = vadd.xlane.f32.xlu0 %v367
        %v403 = vpop.xlane.xlu0 %402
        %404 = vadd.xlane.f32.xlu0 %v368
        %v405 = vpop.xlane.xlu0 %404
        %406 = vadd.xlane.f32.xlu0 %v369
        %v407 = vpop.xlane.xlu0 %406
        %408 = vadd.xlane.f32.xlu0 %v370
        %v409 = vpop.xlane.xlu0 %408
        %410 = vadd.xlane.f32.xlu0 %v371
        %v411 = vpop.xlane.xlu0 %410
        %412 = vadd.xlane.f32.xlu0 %v372
        %v413 = vpop.xlane.xlu0 %412
        %414 = vadd.xlane.f32.xlu0 %v373
        %v415 = vpop.xlane.xlu0 %414
        %416 = vadd.xlane.f32.xlu0 %v374
        %v417 = vpop.xlane.xlu0 %416
        %418 = vadd.xlane.f32.xlu0 %v375
        %v419 = vpop.xlane.xlu0 %418
        %420 = vadd.xlane.f32.xlu0 %v376
        %v421 = vpop.xlane.xlu0 %420
        %422 = vadd.xlane.f32.xlu0 %v377
        %v423 = vpop.xlane.xlu0 %422
        %424 = vadd.xlane.f32.xlu0 %v378
        %v425 = vpop.xlane.xlu0 %424
        %426 = vadd.xlane.f32.xlu0 %v379
        %v427 = vpop.xlane.xlu0 %426
        %428 = vadd.xlane.f32.xlu0 %v380
        %v429 = vpop.xlane.xlu0 %428
        %430 = vadd.xlane.f32.xlu0 %v381
        %v431 = vpop.xlane.xlu0 %430
        %432 = vadd.xlane.f32.xlu0 %v382
        %v433 = vpop.xlane.xlu0 %432
        %434 = vadd.xlane.f32.xlu0 %v383
        %v435 = vpop.xlane.xlu0 %434
        %436 = vadd.xlane.f32.xlu0 %v384
        %v437 = vpop.xlane.xlu0 %436
        %438 = vadd.xlane.f32.xlu0 %v385
        %v439 = vpop.xlane.xlu0 %438
        %440 = vadd.xlane.f32.xlu0 %v386
        %v441 = vpop.xlane.xlu0 %440
        %442 = vadd.xlane.f32.xlu0 %v387
        %v443 = vpop.xlane.xlu0 %442
        %444 = vadd.xlane.f32.xlu0 %v388
        %v445 = vpop.xlane.xlu0 %444
        %446 = vadd.xlane.f32.xlu0 %v389
        %v447 = vpop.xlane.xlu0 %446
        %448 = vadd.xlane.f32.xlu0 %v390
        %v449 = vpop.xlane.xlu0 %448
        %450 = vadd.xlane.f32.xlu0 %v391
        %v451 = vpop.xlane.xlu0 %450
        %452 = vadd.xlane.f32.xlu0 %v392
        %v453 = vpop.xlane.xlu0 %452
        %454 = vadd.xlane.f32.xlu0 %v393
        %v455 = vpop.xlane.xlu0 %454
        %456 = vadd.xlane.f32.xlu0 %v394
        %v457 = vpop.xlane.xlu0 %456
        %458 = vadd.xlane.f32.xlu0 %v395
        %v459 = vpop.xlane.xlu0 %458
        %v460 = vrcp.pop 128.0
        %v461 = vmul.f32 %v397, %v460
        %v462 = vmul.f32 %v399, %v460
        %v463 = vmul.f32 %v401, %v460
        %v464 = vmul.f32 %v403, %v460
        %v465 = vmul.f32 %v405, %v460
        %v466 = vmul.f32 %v407, %v460
        %v467 = vmul.f32 %v409, %v460
        %v468 = vmul.f32 %v411, %v460
        %v469 = vmul.f32 %v413, %v460
        %v470 = vmul.f32 %v415, %v460
        %v471 = vmul.f32 %v417, %v460
        %v472 = vmul.f32 %v419, %v460
        %v473 = vmul.f32 %v421, %v460
        %v474 = vmul.f32 %v423, %v460
        %v475 = vmul.f32 %v425, %v460
        %v476 = vmul.f32 %v427, %v460
        %v477 = vmul.f32 %v429, %v460
        %v478 = vmul.f32 %v431, %v460
        %v479 = vmul.f32 %v433, %v460
        %v480 = vmul.f32 %v435, %v460
        %v481 = vmul.f32 %v437, %v460
        %v482 = vmul.f32 %v439, %v460
        %v483 = vmul.f32 %v441, %v460
        %v484 = vmul.f32 %v443, %v460
        %v485 = vmul.f32 %v445, %v460
        %v486 = vmul.f32 %v447, %v460
        %v487 = vmul.f32 %v449, %v460
        %v488 = vmul.f32 %v451, %v460
        %v489 = vmul.f32 %v453, %v460
        %v490 = vmul.f32 %v455, %v460
        %v491 = vmul.f32 %v457, %v460
        %v492 = vmul.f32 %v459, %v460
        %v493 = vsub.f32 %v364, %v461
        %v494 = vsub.f32 %v365, %v462
        %v495 = vsub.f32 %v366, %v463
        %v496 = vsub.f32 %v367, %v464
        %v497 = vsub.f32 %v368, %v465
        %v498 = vsub.f32 %v369, %v466
        %v499 = vsub.f32 %v370, %v467
        %v500 = vsub.f32 %v371, %v468
        %v501 = vsub.f32 %v372, %v469
        %v502 = vsub.f32 %v373, %v470
        %v503 = vsub.f32 %v374, %v471
        %v504 = vsub.f32 %v375, %v472
        %v505 = vsub.f32 %v376, %v473
        %v506 = vsub.f32 %v377, %v474
        %v507 = vsub.f32 %v378, %v475
        %v508 = vsub.f32 %v379, %v476
        %v509 = vsub.f32 %v380, %v477
        %v510 = vsub.f32 %v381, %v478
        %v511 = vsub.f32 %v382, %v479
        %v512 = vsub.f32 %v383, %v480
        %v513 = vsub.f32 %v384, %v481
        %v514 = vsub.f32 %v385, %v482
        %v515 = vsub.f32 %v386, %v483
        %v516 = vsub.f32 %v387, %v484
        %v517 = vsub.f32 %v388, %v485
        %v518 = vsub.f32 %v389, %v486
        %v519 = vsub.f32 %v390, %v487
        %v520 = vsub.f32 %v391, %v488
        %v521 = vsub.f32 %v392, %v489
        %v522 = vsub.f32 %v393, %v490
        %v523 = vsub.f32 %v394, %v491
        %v524 = vsub.f32 %v395, %v492
        %v525 = vmul.f32 %v493, %v493
        %v526 = vmul.f32 %v494, %v494
        %v527 = vmul.f32 %v495, %v495
        %v528 = vmul.f32 %v496, %v496
        %v529 = vmul.f32 %v497, %v497
        %v530 = vmul.f32 %v498, %v498
        %v531 = vmul.f32 %v499, %v499
        %v532 = vmul.f32 %v500, %v500
        %v533 = vmul.f32 %v501, %v501
        %v534 = vmul.f32 %v502, %v502
        %v535 = vmul.f32 %v503, %v503
        %v536 = vmul.f32 %v504, %v504
        %v537 = vmul.f32 %v505, %v505
        %v538 = vmul.f32 %v506, %v506
        %v539 = vmul.f32 %v507, %v507
        %v540 = vmul.f32 %v508, %v508
        %v541 = vmul.f32 %v509, %v509
        %v542 = vmul.f32 %v510, %v510
        %v543 = vmul.f32 %v511, %v511
        %v544 = vmul.f32 %v512, %v512
        %v545 = vmul.f32 %v513, %v513
        %v546 = vmul.f32 %v514, %v514
        %v547 = vmul.f32 %v515, %v515
        %v548 = vmul.f32 %v516, %v516
        %v549 = vmul.f32 %v517, %v517
        %v550 = vmul.f32 %v518, %v518
        %v551 = vmul.f32 %v519, %v519
        %v552 = vmul.f32 %v520, %v520
        %v553 = vmul.f32 %v521, %v521
        %v554 = vmul.f32 %v522, %v522
        %v555 = vmul.f32 %v523, %v523
        %v556 = vmul.f32 %v524, %v524
        %557 = vadd.xlane.f32.xlu0 %v525
        %v558 = vpop.xlane.xlu0 %557
        %559 = vadd.xlane.f32.xlu0 %v526
        %v560 = vpop.xlane.xlu0 %559
        %561 = vadd.xlane.f32.xlu0 %v527
        %v562 = vpop.xlane.xlu0 %561
        %563 = vadd.xlane.f32.xlu0 %v528
        %v564 = vpop.xlane.xlu0 %563
        %565 = vadd.xlane.f32.xlu0 %v529
        %v566 = vpop.xlane.xlu0 %565
        %567 = vadd.xlane.f32.xlu0 %v530
        %v568 = vpop.xlane.xlu0 %567
        %569 = vadd.xlane.f32.xlu0 %v531
        %v570 = vpop.xlane.xlu0 %569
        %571 = vadd.xlane.f32.xlu0 %v532
        %v572 = vpop.xlane.xlu0 %571
        %573 = vadd.xlane.f32.xlu0 %v533
        %v574 = vpop.xlane.xlu0 %573
        %575 = vadd.xlane.f32.xlu0 %v534
        %v576 = vpop.xlane.xlu0 %575
        %577 = vadd.xlane.f32.xlu0 %v535
        %v578 = vpop.xlane.xlu0 %577
        %579 = vadd.xlane.f32.xlu0 %v536
        %v580 = vpop.xlane.xlu0 %579
        %581 = vadd.xlane.f32.xlu0 %v537
        %v582 = vpop.xlane.xlu0 %581
        %583 = vadd.xlane.f32.xlu0 %v538
        %v584 = vpop.xlane.xlu0 %583
        %585 = vadd.xlane.f32.xlu0 %v539
        %v586 = vpop.xlane.xlu0 %585
        %587 = vadd.xlane.f32.xlu0 %v540
        %v588 = vpop.xlane.xlu0 %587
        %589 = vadd.xlane.f32.xlu0 %v541
        %v590 = vpop.xlane.xlu0 %589
        %591 = vadd.xlane.f32.xlu0 %v542
        %v592 = vpop.xlane.xlu0 %591
        %593 = vadd.xlane.f32.xlu0 %v543
        %v594 = vpop.xlane.xlu0 %593
        %595 = vadd.xlane.f32.xlu0 %v544
        %v596 = vpop.xlane.xlu0 %595
        %597 = vadd.xlane.f32.xlu0 %v545
        %v598 = vpop.xlane.xlu0 %597
        %599 = vadd.xlane.f32.xlu0 %v546
        %v600 = vpop.xlane.xlu0 %599
        %601 = vadd.xlane.f32.xlu0 %v547
        %v602 = vpop.xlane.xlu0 %601
        %603 = vadd.xlane.f32.xlu0 %v548
        %v604 = vpop.xlane.xlu0 %603
        %605 = vadd.xlane.f32.xlu0 %v549
        %v606 = vpop.xlane.xlu0 %605
        %607 = vadd.xlane.f32.xlu0 %v550
        %v608 = vpop.xlane.xlu0 %607
        %609 = vadd.xlane.f32.xlu0 %v551
        %v610 = vpop.xlane.xlu0 %609
        %611 = vadd.xlane.f32.xlu0 %v552
        %v612 = vpop.xlane.xlu0 %611
        %613 = vadd.xlane.f32.xlu0 %v553
        %v614 = vpop.xlane.xlu0 %613
        %615 = vadd.xlane.f32.xlu0 %v554
        %v616 = vpop.xlane.xlu0 %615
        %617 = vadd.xlane.f32.xlu0 %v555
        %v618 = vpop.xlane.xlu0 %617
        %619 = vadd.xlane.f32.xlu0 %v556
        %v620 = vpop.xlane.xlu0 %619
        %v621 = vmul.f32 %v558, %v460
        %v622 = vmul.f32 %v560, %v460
        %v623 = vmul.f32 %v562, %v460
        %v624 = vmul.f32 %v564, %v460
        %v625 = vmul.f32 %v566, %v460
        %v626 = vmul.f32 %v568, %v460
        %v627 = vmul.f32 %v570, %v460
        %v628 = vmul.f32 %v572, %v460
        %v629 = vmul.f32 %v574, %v460
        %v630 = vmul.f32 %v576, %v460
        %v631 = vmul.f32 %v578, %v460
        %v632 = vmul.f32 %v580, %v460
        %v633 = vmul.f32 %v582, %v460
        %v634 = vmul.f32 %v584, %v460
        %v635 = vmul.f32 %v586, %v460
        %v636 = vmul.f32 %v588, %v460
        %v637 = vmul.f32 %v590, %v460
        %v638 = vmul.f32 %v592, %v460
        %v639 = vmul.f32 %v594, %v460
        %v640 = vmul.f32 %v596, %v460
        %v641 = vmul.f32 %v598, %v460
        %v642 = vmul.f32 %v600, %v460
        %v643 = vmul.f32 %v602, %v460
        %v644 = vmul.f32 %v604, %v460
        %v645 = vmul.f32 %v606, %v460
        %v646 = vmul.f32 %v608, %v460
        %v647 = vmul.f32 %v610, %v460
        %v648 = vmul.f32 %v612, %v460
        %v649 = vmul.f32 %v614, %v460
        %v650 = vmul.f32 %v616, %v460
        %v651 = vmul.f32 %v618, %v460
        %v652 = vmul.f32 %v620, %v460
        %v653 = vadd.f32 %v621, 1e-06
        %v654 = vadd.f32 %v622, 1e-06
        %v655 = vadd.f32 %v623, 1e-06
        %v656 = vadd.f32 %v624, 1e-06
        %v657 = vadd.f32 %v625, 1e-06
        %v658 = vadd.f32 %v626, 1e-06
        %v659 = vadd.f32 %v627, 1e-06
        %v660 = vadd.f32 %v628, 1e-06
        %v661 = vadd.f32 %v629, 1e-06
        %v662 = vadd.f32 %v630, 1e-06
        %v663 = vadd.f32 %v631, 1e-06
        %v664 = vadd.f32 %v632, 1e-06
        %v665 = vadd.f32 %v633, 1e-06
        %v666 = vadd.f32 %v634, 1e-06
        %v667 = vadd.f32 %v635, 1e-06
        %v668 = vadd.f32 %v636, 1e-06
        %v669 = vadd.f32 %v637, 1e-06
        %v670 = vadd.f32 %v638, 1e-06
        %v671 = vadd.f32 %v639, 1e-06
        %v672 = vadd.f32 %v640, 1e-06
        %v673 = vadd.f32 %v641, 1e-06
        %v674 = vadd.f32 %v642, 1e-06
        %v675 = vadd.f32 %v643, 1e-06
        %v676 = vadd.f32 %v644, 1e-06
        %v677 = vadd.f32 %v645, 1e-06
        %v678 = vadd.f32 %v646, 1e-06
        %v679 = vadd.f32 %v647, 1e-06
        %v680 = vadd.f32 %v648, 1e-06
        %v681 = vadd.f32 %v649, 1e-06
        %v682 = vadd.f32 %v650, 1e-06
        %v683 = vadd.f32 %v651, 1e-06
        %v684 = vadd.f32 %v652, 1e-06
        %v685 = vrsqrt.pop %v653
        %v686 = vrsqrt.pop %v654
        %v687 = vrsqrt.pop %v655
        %v688 = vrsqrt.pop %v656
        %v689 = vrsqrt.pop %v657
        %v690 = vrsqrt.pop %v658
        %v691 = vrsqrt.pop %v659
        %v692 = vrsqrt.pop %v660
        %v693 = vrsqrt.pop %v661
        %v694 = vrsqrt.pop %v662
        %v695 = vrsqrt.pop %v663
        %v696 = vrsqrt.pop %v664
        %v697 = vrsqrt.pop %v665
        %v698 = vrsqrt.pop %v666
        %v699 = vrsqrt.pop %v667
        %v700 = vrsqrt.pop %v668
        %v701 = vrsqrt.pop %v669
        %v702 = vrsqrt.pop %v670
        %v703 = vrsqrt.pop %v671
        %v704 = vrsqrt.pop %v672
        %v705 = vrsqrt.pop %v673
        %v706 = vrsqrt.pop %v674
        %v707 = vrsqrt.pop %v675
        %v708 = vrsqrt.pop %v676
        %v709 = vrsqrt.pop %v677
        %v710 = vrsqrt.pop %v678
        %v711 = vrsqrt.pop %v679
        %v712 = vrsqrt.pop %v680
        %v713 = vrsqrt.pop %v681
        %v714 = vrsqrt.pop %v682
        %v715 = vrsqrt.pop %v683
        %v716 = vrsqrt.pop %v684
        %v717 = vmul.f32 %v493, %v685
        %v718 = vmul.f32 %v494, %v686
        %v719 = vmul.f32 %v495, %v687
        %v720 = vmul.f32 %v496, %v688
        %v721 = vmul.f32 %v497, %v689
        %v722 = vmul.f32 %v498, %v690
        %v723 = vmul.f32 %v499, %v691
        %v724 = vmul.f32 %v500, %v692
        %v725 = vmul.f32 %v501, %v693
        %v726 = vmul.f32 %v502, %v694
        %v727 = vmul.f32 %v503, %v695
        %v728 = vmul.f32 %v504, %v696
        %v729 = vmul.f32 %v505, %v697
        %v730 = vmul.f32 %v506, %v698
        %v731 = vmul.f32 %v507, %v699
        %v732 = vmul.f32 %v508, %v700
        %v733 = vmul.f32 %v509, %v701
        %v734 = vmul.f32 %v510, %v702
        %v735 = vmul.f32 %v511, %v703
        %v736 = vmul.f32 %v512, %v704
        %v737 = vmul.f32 %v513, %v705
        %v738 = vmul.f32 %v514, %v706
        %v739 = vmul.f32 %v515, %v707
        %v740 = vmul.f32 %v516, %v708
        %v741 = vmul.f32 %v517, %v709
        %v742 = vmul.f32 %v518, %v710
        %v743 = vmul.f32 %v519, %v711
        %v744 = vmul.f32 %v520, %v712
        %v745 = vmul.f32 %v521, %v713
        %v746 = vmul.f32 %v522, %v714
        %v747 = vmul.f32 %v523, %v715
        %v748 = vmul.f32 %v524, %v716
        %v749 = vld [vmem:[%s309] sm:$0x1]
        %v751 = vlaneseq
        %v752 = vshrl.u32 %v751, 7
        %v753 = vsub.s32 0, %v752
        %v754 = vrot.slane %v749, %v753
        %v756 = vmul.f32 %v754, %v717
        %v757 = vmul.f32 %v754, %v718
        %v758 = vmul.f32 %v754, %v719
        %v759 = vmul.f32 %v754, %v720
        %v760 = vmul.f32 %v754, %v721
        %v761 = vmul.f32 %v754, %v722
        %v762 = vmul.f32 %v754, %v723
        %v763 = vmul.f32 %v754, %v724
        %v764 = vmul.f32 %v754, %v725
        %v765 = vmul.f32 %v754, %v726
        %v766 = vmul.f32 %v754, %v727
        %v767 = vmul.f32 %v754, %v728
        %v768 = vmul.f32 %v754, %v729
        %v769 = vmul.f32 %v754, %v730
        %v770 = vmul.f32 %v754, %v731
        %v771 = vmul.f32 %v754, %v732
        %v772 = vmul.f32 %v754, %v733
        %v773 = vmul.f32 %v754, %v734
        %v774 = vmul.f32 %v754, %v735
        %v775 = vmul.f32 %v754, %v736
        %v776 = vmul.f32 %v754, %v737
        %v777 = vmul.f32 %v754, %v738
        %v778 = vmul.f32 %v754, %v739
        %v779 = vmul.f32 %v754, %v740
        %v780 = vmul.f32 %v754, %v741
        %v781 = vmul.f32 %v754, %v742
        %v782 = vmul.f32 %v754, %v743
        %v783 = vmul.f32 %v754, %v744
        %v784 = vmul.f32 %v754, %v745
        %v785 = vmul.f32 %v754, %v746
        %v786 = vmul.f32 %v754, %v747
        %v787 = vmul.f32 %v754, %v748
        %v788 = vld [vmem:[%s354] sm:$0x1]
        %v790 = vlaneseq
        %v791 = vshrl.u32 %v790, 7
        %v792 = vsub.s32 0, %v791
        %v793 = vrot.slane %v788, %v792
        %v795 = vadd.f32 %v756, %v793
        %v796 = vadd.f32 %v757, %v793
        %v797 = vadd.f32 %v758, %v793
        %v798 = vadd.f32 %v759, %v793
        %v799 = vadd.f32 %v760, %v793
        %v800 = vadd.f32 %v761, %v793
        %v801 = vadd.f32 %v762, %v793
        %v802 = vadd.f32 %v763, %v793
        %v803 = vadd.f32 %v764, %v793
        %v804 = vadd.f32 %v765, %v793
        %v805 = vadd.f32 %v766, %v793
        %v806 = vadd.f32 %v767, %v793
        %v807 = vadd.f32 %v768, %v793
        %v808 = vadd.f32 %v769, %v793
        %v809 = vadd.f32 %v770, %v793
        %v810 = vadd.f32 %v771, %v793
        %v811 = vadd.f32 %v772, %v793
        %v812 = vadd.f32 %v773, %v793
        %v813 = vadd.f32 %v774, %v793
        %v814 = vadd.f32 %v775, %v793
        %v815 = vadd.f32 %v776, %v793
        %v816 = vadd.f32 %v777, %v793
        %v817 = vadd.f32 %v778, %v793
        %v818 = vadd.f32 %v779, %v793
        %v819 = vadd.f32 %v780, %v793
        %v820 = vadd.f32 %v781, %v793
        %v821 = vadd.f32 %v782, %v793
        %v822 = vadd.f32 %v783, %v793
        %v823 = vadd.f32 %v784, %v793
        %v824 = vadd.f32 %v785, %v793
        %v825 = vadd.f32 %v786, %v793
        %v826 = vadd.f32 %v787, %v793
        %v827 = vpack.c.bf16 %v796, %v795
        %v828 = vpack.c.bf16 %v798, %v797
        %v829 = vpack.c.bf16 %v800, %v799
        %v830 = vpack.c.bf16 %v802, %v801
        %v831 = vpack.c.bf16 %v804, %v803
        %v832 = vpack.c.bf16 %v806, %v805
        %v833 = vpack.c.bf16 %v808, %v807
        %v834 = vpack.c.bf16 %v810, %v809
        %v835 = vpack.c.bf16 %v812, %v811
        %v836 = vpack.c.bf16 %v814, %v813
        %v837 = vpack.c.bf16 %v816, %v815
        %v838 = vpack.c.bf16 %v818, %v817
        %v839 = vpack.c.bf16 %v820, %v819
        %v840 = vpack.c.bf16 %v822, %v821
        %v841 = vpack.c.bf16 %v824, %v823
        %v842 = vpack.c.bf16 %v826, %v825
        %v843 = vld [vmem:[#allocation7] sm:$0xff]
        %v844 = vld [vmem:[#allocation7 + $0x8] sm:$0xff]
        %v845 = vld [vmem:[#allocation7 + $0x10] sm:$0xff]
        %v846 = vld [vmem:[#allocation7 + $0x18] sm:$0xff]
        %v847 = vld [vmem:[#allocation7 + $0x20] sm:$0xff]
        %v848 = vld [vmem:[#allocation7 + $0x28] sm:$0xff]
        %v849 = vld [vmem:[#allocation7 + $0x30] sm:$0xff]
        %v850 = vld [vmem:[#allocation7 + $0x38] sm:$0xff]
        %v851 = vld [vmem:[#allocation7 + $0x40] sm:$0xff]
        %v852 = vld [vmem:[#allocation7 + $0x48] sm:$0xff]
        %v853 = vld [vmem:[#allocation7 + $0x50] sm:$0xff]
        %v854 = vld [vmem:[#allocation7 + $0x58] sm:$0xff]
        %v855 = vld [vmem:[#allocation7 + $0x60] sm:$0xff]
        %v856 = vld [vmem:[#allocation7 + $0x68] sm:$0xff]
        %v857 = vld [vmem:[#allocation7 + $0x70] sm:$0xff]
        %v858 = vld [vmem:[#allocation7 + $0x78] sm:$0xff]
        %v859 = vld [vmem:[%s359] sm:$0x3]
        %v861 = vlaneseq
        %v862 = vshrl.u32 %v861, 7
        %v863 = vsub.s32 0, %v862
        %v864 = vrot.slane %v859, %v863
        %v865 = vlaneseq
        %v866 = vshrl.u32 %v865, 7
        %v867 = vsub.s32 1, %v866
        %v868 = vrot.slane %v859, %v867
        %v887 = vunpack.c.l.b16 %v843
        %v888 = vunpack.c.h.b16 %v843
        %v889 = vunpack.c.l.b16 %v844
        %v890 = vunpack.c.h.b16 %v844
        %v891 = vunpack.c.l.b16 %v845
        %v892 = vunpack.c.h.b16 %v845
        %v893 = vunpack.c.l.b16 %v846
        %v894 = vunpack.c.h.b16 %v846
        %v895 = vunpack.c.l.b16 %v847
        %v896 = vunpack.c.h.b16 %v847
        %v897 = vunpack.c.l.b16 %v848
        %v898 = vunpack.c.h.b16 %v848
        %v899 = vunpack.c.l.b16 %v849
        %v900 = vunpack.c.h.b16 %v849
        %v901 = vunpack.c.l.b16 %v850
        %v902 = vunpack.c.h.b16 %v850
        %v903 = vunpack.c.l.b16 %v851
        %v904 = vunpack.c.h.b16 %v851
        %v905 = vunpack.c.l.b16 %v852
        %v906 = vunpack.c.h.b16 %v852
        %v907 = vunpack.c.l.b16 %v853
        %v908 = vunpack.c.h.b16 %v853
        %v909 = vunpack.c.l.b16 %v854
        %v910 = vunpack.c.h.b16 %v854
        %v911 = vunpack.c.l.b16 %v855
        %v912 = vunpack.c.h.b16 %v855
        %v913 = vunpack.c.l.b16 %v856
        %v914 = vunpack.c.h.b16 %v856
        %v915 = vunpack.c.l.b16 %v857
        %v916 = vunpack.c.h.b16 %v857
        %v917 = vunpack.c.l.b16 %v858
        %v918 = vunpack.c.h.b16 %v858
        %v919 = vpack.c.b16 %v889, %v887
        %v920 = vpack.c.b16 %v890, %v888
        %v921 = vpack.c.b16 %v893, %v891
        %v922 = vpack.c.b16 %v894, %v892
        %v923 = vpack.c.b16 %v897, %v895
        %v924 = vpack.c.b16 %v898, %v896
        %v925 = vpack.c.b16 %v901, %v899
        %v926 = vpack.c.b16 %v902, %v900
        %v927 = vpack.c.b16 %v905, %v903
        %v928 = vpack.c.b16 %v906, %v904
        %v929 = vpack.c.b16 %v909, %v907
        %v930 = vpack.c.b16 %v910, %v908
        %v931 = vpack.c.b16 %v913, %v911
        %v932 = vpack.c.b16 %v914, %v912
        %v933 = vpack.c.b16 %v917, %v915
        %v934 = vpack.c.b16 %v918, %v916
        %951 = vmatprep.subr.bf16.mxu0 %v934
        %952 = vmatpush1.bf16.msra.mxu0 %v933
        %953 = vmatprep.subr.bf16.mxu0 %v932
        %954 = vmatpush1.bf16.msra.mxu0 %v931
        %955 = vmatprep.subr.bf16.mxu0 %v930
        %956 = vmatpush1.bf16.msra.mxu0 %v929
        %957 = vmatprep.subr.bf16.mxu0 %v928
        %958 = vmatpush1.bf16.msra.mxu0 %v927
        %959 = vmatprep.subr.bf16.mxu0 %v926
        %960 = vmatpush1.bf16.msra.mxu0 %v925
        %961 = vmatprep.subr.bf16.mxu0 %v924
        %962 = vmatpush1.bf16.msra.mxu0 %v923
        %963 = vmatprep.subr.bf16.mxu0 %v922
        %964 = vmatpush1.bf16.msra.mxu0 %v921
        %965 = vmatprep.subr.bf16.mxu0 %v920
        %966 = vmatpush1.bf16.msra.mxu0 %v919
        %967 = vmatprep.subr.bf16.mxu0 0
        %968 = vmatpush2.bf16.msra.mxu0 0
        %969 = vmatprep.subr.bf16.mxu0 0
        %970 = vmatpush2.bf16.msra.mxu0 0
        %971 = vmatprep.subr.bf16.mxu0 0
        %972 = vmatpush2.bf16.msra.mxu0 0
        %973 = vmatprep.subr.bf16.mxu0 0
        %974 = vmatpush2.bf16.msra.mxu0 0
        %975 = vmatprep.subr.bf16.mxu0 0
        %976 = vmatpush2.bf16.msra.mxu0 0
        %977 = vmatprep.subr.bf16.mxu0 0
        %978 = vmatpush2.bf16.msra.mxu0 0
        %979 = vmatprep.subr.bf16.mxu0 0
        %980 = vmatpush2.bf16.msra.mxu0 0
        %981 = vmatprep.subr.bf16.mxu0 0
        %982 = vmatpush2.bf16.msra.mxu0 0
        %983 = vmatprep.mubr.bf16.mxu0 0
        %984 = vmatmul.mubr.bf16.gmra.mxu0 %v827
        %v985 = vpop.f32.mrf.mxu0
        %v986 = vadd.f32 %v864, %v985
        %v987 = vpop.f32.mrf.mxu0
        %v988 = vadd.f32 %v868, %v987
        %v989 = vpop.f32.mrf.mxu0
        %v990 = vadd.f32 %v864, %v989
        %v991 = vpop.f32.mrf.mxu0
        %v992 = vadd.f32 %v868, %v991
        %993 = vmatprep.mubr.bf16.mxu0 0
        %994 = vmatmul.mubr.bf16.gmra.mxu0 %v828
        %v995 = vpop.f32.mrf.mxu0
        %v996 = vadd.f32 %v864, %v995
        %v997 = vpop.f32.mrf.mxu0
        %v998 = vadd.f32 %v868, %v997
        %v999 = vpop.f32.mrf.mxu0
        %v1000 = vadd.f32 %v864, %v999
        %v1001 = vpop.f32.mrf.mxu0
        %v1002 = vadd.f32 %v868, %v1001
        %1003 = vmatprep.mubr.bf16.mxu0 0
        %1004 = vmatmul.mubr.bf16.gmra.mxu0 %v829
        %v1005 = vpop.f32.mrf.mxu0
        %v1006 = vadd.f32 %v864, %v1005
        %v1007 = vpop.f32.mrf.mxu0
        %v1008 = vadd.f32 %v868, %v1007
        %v1009 = vpop.f32.mrf.mxu0
        %v1010 = vadd.f32 %v864, %v1009
        %v1011 = vpop.f32.mrf.mxu0
        %v1012 = vadd.f32 %v868, %v1011
        %1013 = vmatprep.mubr.bf16.mxu0 0
        %1014 = vmatmul.mubr.bf16.gmra.mxu0 %v830
        %v1015 = vpop.f32.mrf.mxu0
        %v1016 = vadd.f32 %v864, %v1015
        %v1017 = vpop.f32.mrf.mxu0
        %v1018 = vadd.f32 %v868, %v1017
        %v1019 = vpop.f32.mrf.mxu0
        %v1020 = vadd.f32 %v864, %v1019
        %v1021 = vpop.f32.mrf.mxu0
        %v1022 = vadd.f32 %v868, %v1021
        %1023 = vmatprep.mubr.bf16.mxu0 0
        %1024 = vmatmul.mubr.bf16.gmra.mxu0 %v831
        %v1025 = vpop.f32.mrf.mxu0
        %v1026 = vadd.f32 %v864, %v1025
        %v1027 = vpop.f32.mrf.mxu0
        %v1028 = vadd.f32 %v868, %v1027
        %v1029 = vpop.f32.mrf.mxu0
        %v1030 = vadd.f32 %v864, %v1029
        %v1031 = vpop.f32.mrf.mxu0
        %v1032 = vadd.f32 %v868, %v1031
        %1033 = vmatprep.mubr.bf16.mxu0 0
        %1034 = vmatmul.mubr.bf16.gmra.mxu0 %v832
        %v1035 = vpop.f32.mrf.mxu0
        %v1036 = vadd.f32 %v864, %v1035
        %v1037 = vpop.f32.mrf.mxu0
        %v1038 = vadd.f32 %v868, %v1037
        %v1039 = vpop.f32.mrf.mxu0
        %v1040 = vadd.f32 %v864, %v1039
        %v1041 = vpop.f32.mrf.mxu0
        %v1042 = vadd.f32 %v868, %v1041
        %1043 = vmatprep.mubr.bf16.mxu0 0
        %1044 = vmatmul.mubr.bf16.gmra.mxu0 %v833
        %v1045 = vpop.f32.mrf.mxu0
        %v1046 = vadd.f32 %v864, %v1045
        %v1047 = vpop.f32.mrf.mxu0
        %v1048 = vadd.f32 %v868, %v1047
        %v1049 = vpop.f32.mrf.mxu0
        %v1050 = vadd.f32 %v864, %v1049
        %v1051 = vpop.f32.mrf.mxu0
        %v1052 = vadd.f32 %v868, %v1051
        %1053 = vmatprep.mubr.bf16.mxu0 0
        %1054 = vmatmul.mubr.bf16.gmra.mxu0 %v834
        %v1055 = vpop.f32.mrf.mxu0
        %v1056 = vadd.f32 %v864, %v1055
        %v1057 = vpop.f32.mrf.mxu0
        %v1058 = vadd.f32 %v868, %v1057
        %v1059 = vpop.f32.mrf.mxu0
        %v1060 = vadd.f32 %v864, %v1059
        %v1061 = vpop.f32.mrf.mxu0
        %v1062 = vadd.f32 %v868, %v1061
        %1063 = vmatprep.mubr.bf16.mxu0 0
        %1064 = vmatmul.mubr.bf16.gmra.mxu0 %v835
        %v1065 = vpop.f32.mrf.mxu0
        %v1066 = vadd.f32 %v864, %v1065
        %v1067 = vpop.f32.mrf.mxu0
        %v1068 = vadd.f32 %v868, %v1067
        %v1069 = vpop.f32.mrf.mxu0
        %v1070 = vadd.f32 %v864, %v1069
        %v1071 = vpop.f32.mrf.mxu0
        %v1072 = vadd.f32 %v868, %v1071
        %1073 = vmatprep.mubr.bf16.mxu0 0
        %1074 = vmatmul.mubr.bf16.gmra.mxu0 %v836
        %v1075 = vpop.f32.mrf.mxu0
        %v1076 = vadd.f32 %v864, %v1075
        %v1077 = vpop.f32.mrf.mxu0
        %v1078 = vadd.f32 %v868, %v1077
        %v1079 = vpop.f32.mrf.mxu0
        %v1080 = vadd.f32 %v864, %v1079
        %v1081 = vpop.f32.mrf.mxu0
        %v1082 = vadd.f32 %v868, %v1081
        %1083 = vmatprep.mubr.bf16.mxu0 0
        %1084 = vmatmul.mubr.bf16.gmra.mxu0 %v837
        %v1085 = vpop.f32.mrf.mxu0
        %v1086 = vadd.f32 %v864, %v1085
        %v1087 = vpop.f32.mrf.mxu0
        %v1088 = vadd.f32 %v868, %v1087
        %v1089 = vpop.f32.mrf.mxu0
        %v1090 = vadd.f32 %v864, %v1089
        %v1091 = vpop.f32.mrf.mxu0
        %v1092 = vadd.f32 %v868, %v1091
        %1093 = vmatprep.mubr.bf16.mxu0 0
        %1094 = vmatmul.mubr.bf16.gmra.mxu0 %v838
        %v1095 = vpop.f32.mrf.mxu0
        %v1096 = vadd.f32 %v864, %v1095
        %v1097 = vpop.f32.mrf.mxu0
        %v1098 = vadd.f32 %v868, %v1097
        %v1099 = vpop.f32.mrf.mxu0
        %v1100 = vadd.f32 %v864, %v1099
        %v1101 = vpop.f32.mrf.mxu0
        %v1102 = vadd.f32 %v868, %v1101
        %1103 = vmatprep.mubr.bf16.mxu0 0
        %1104 = vmatmul.mubr.bf16.gmra.mxu0 %v839
        %v1105 = vpop.f32.mrf.mxu0
        %v1106 = vadd.f32 %v864, %v1105
        %v1107 = vpop.f32.mrf.mxu0
        %v1108 = vadd.f32 %v868, %v1107
        %v1109 = vpop.f32.mrf.mxu0
        %v1110 = vadd.f32 %v864, %v1109
        %v1111 = vpop.f32.mrf.mxu0
        %v1112 = vadd.f32 %v868, %v1111
        %1113 = vmatprep.mubr.bf16.mxu0 0
        %1114 = vmatmul.mubr.bf16.gmra.mxu0 %v840
        %v1115 = vpop.f32.mrf.mxu0
        %v1116 = vadd.f32 %v864, %v1115
        %v1117 = vpop.f32.mrf.mxu0
        %v1118 = vadd.f32 %v868, %v1117
        %v1119 = vpop.f32.mrf.mxu0
        %v1120 = vadd.f32 %v864, %v1119
        %v1121 = vpop.f32.mrf.mxu0
        %v1122 = vadd.f32 %v868, %v1121
        %1123 = vmatprep.mubr.bf16.mxu0 0
        %1124 = vmatmul.mubr.bf16.gmra.mxu0 %v841
        %v1125 = vpop.f32.mrf.mxu0
        %v1126 = vadd.f32 %v864, %v1125
        %v1127 = vpop.f32.mrf.mxu0
        %v1128 = vadd.f32 %v868, %v1127
        %v1129 = vpop.f32.mrf.mxu0
        %v1130 = vadd.f32 %v864, %v1129
        %v1131 = vpop.f32.mrf.mxu0
        %v1132 = vadd.f32 %v868, %v1131
        %1133 = vmatprep.mubr.bf16.mxu0 0
        %1134 = vmatmul.mubr.bf16.gmra.mxu0 %v842
        %v1135 = vpop.f32.mrf.mxu0
        %v1136 = vadd.f32 %v864, %v1135
        %v1137 = vpop.f32.mrf.mxu0
        %v1138 = vadd.f32 %v868, %v1137
        %v1139 = vpop.f32.mrf.mxu0
        %v1140 = vadd.f32 %v864, %v1139
        %v1141 = vpop.f32.mrf.mxu0
        %v1142 = vadd.f32 %v868, %v1141
        %1143 = vdwg.mxu0
        %1144 = vst [vmem:[%s350] sm:$0xff] %v986
        %1145 = vst [vmem:[%s350 + $0x8] sm:$0xff] %v988
        %1146 = vst [vmem:[%s350 + $0x10] sm:$0xff] %v990
        %1147 = vst [vmem:[%s350 + $0x18] sm:$0xff] %v992
        %1148 = vst [vmem:[%s350 + $0x20] sm:$0xff] %v996
        %1149 = vst [vmem:[%s350 + $0x28] sm:$0xff] %v998
        %1150 = vst [vmem:[%s350 + $0x30] sm:$0xff] %v1000
        %1151 = vst [vmem:[%s350 + $0x38] sm:$0xff] %v1002
        %1152 = vst [vmem:[%s350 + $0x40] sm:$0xff] %v1006
        %1153 = vst [vmem:[%s350 + $0x48] sm:$0xff] %v1008
        %1154 = vst [vmem:[%s350 + $0x50] sm:$0xff] %v1010
        %1155 = vst [vmem:[%s350 + $0x58] sm:$0xff] %v1012
        %1156 = vst [vmem:[%s350 + $0x60] sm:$0xff] %v1016
        %1157 = vst [vmem:[%s350 + $0x68] sm:$0xff] %v1018
        %1158 = vst [vmem:[%s350 + $0x70] sm:$0xff] %v1020
        %1159 = vst [vmem:[%s350 + $0x78] sm:$0xff] %v1022
        %1160 = vst [vmem:[%s350 + $0x80] sm:$0xff] %v1026
        %1161 = vst [vmem:[%s350 + $0x88] sm:$0xff] %v1028
        %1162 = vst [vmem:[%s350 + $0x90] sm:$0xff] %v1030
        %1163 = vst [vmem:[%s350 + $0x98] sm:$0xff] %v1032
        %1164 = vst [vmem:[%s350 + $0xa0] sm:$0xff] %v1036
        %1165 = vst [vmem:[%s350 + $0xa8] sm:$0xff] %v1038
        %1166 = vst [vmem:[%s350 + $0xb0] sm:$0xff] %v1040
        %1167 = vst [vmem:[%s350 + $0xb8] sm:$0xff] %v1042
        %1168 = vst [vmem:[%s350 + $0xc0] sm:$0xff] %v1046
        %1169 = vst [vmem:[%s350 + $0xc8] sm:$0xff] %v1048
        %1170 = vst [vmem:[%s350 + $0xd0] sm:$0xff] %v1050
        %1171 = vst [vmem:[%s350 + $0xd8] sm:$0xff] %v1052
        %1172 = vst [vmem:[%s350 + $0xe0] sm:$0xff] %v1056
        %1173 = vst [vmem:[%s350 + $0xe8] sm:$0xff] %v1058
        %1174 = vst [vmem:[%s350 + $0xf0] sm:$0xff] %v1060
        %1175 = vst [vmem:[%s350 + $0xf8] sm:$0xff] %v1062
        %1176 = vst [vmem:[%s350 + $0x100] sm:$0xff] %v1066
        %1177 = vst [vmem:[%s350 + $0x108] sm:$0xff] %v1068
        %1178 = vst [vmem:[%s350 + $0x110] sm:$0xff] %v1070
        %1179 = vst [vmem:[%s350 + $0x118] sm:$0xff] %v1072
        %1180 = vst [vmem:[%s350 + $0x120] sm:$0xff] %v1076
        %1181 = vst [vmem:[%s350 + $0x128] sm:$0xff] %v1078
        %1182 = vst [vmem:[%s350 + $0x130] sm:$0xff] %v1080
        %1183 = vst [vmem:[%s350 + $0x138] sm:$0xff] %v1082
        %1184 = vst [vmem:[%s350 + $0x140] sm:$0xff] %v1086
        %1185 = vst [vmem:[%s350 + $0x148] sm:$0xff] %v1088
        %1186 = vst [vmem:[%s350 + $0x150] sm:$0xff] %v1090
        %1187 = vst [vmem:[%s350 + $0x158] sm:$0xff] %v1092
        %1188 = vst [vmem:[%s350 + $0x160] sm:$0xff] %v1096
        %1189 = vst [vmem:[%s350 + $0x168] sm:$0xff] %v1098
        %1190 = vst [vmem:[%s350 + $0x170] sm:$0xff] %v1100
        %1191 = vst [vmem:[%s350 + $0x178] sm:$0xff] %v1102
        %1192 = vst [vmem:[%s350 + $0x180] sm:$0xff] %v1106
        %1193 = vst [vmem:[%s350 + $0x188] sm:$0xff] %v1108
        %1194 = vst [vmem:[%s350 + $0x190] sm:$0xff] %v1110
        %1195 = vst [vmem:[%s350 + $0x198] sm:$0xff] %v1112
        %1196 = vst [vmem:[%s350 + $0x1a0] sm:$0xff] %v1116
        %1197 = vst [vmem:[%s350 + $0x1a8] sm:$0xff] %v1118
        %1198 = vst [vmem:[%s350 + $0x1b0] sm:$0xff] %v1120
        %1199 = vst [vmem:[%s350 + $0x1b8] sm:$0xff] %v1122
        %1200 = vst [vmem:[%s350 + $0x1c0] sm:$0xff] %v1126
        %1201 = vst [vmem:[%s350 + $0x1c8] sm:$0xff] %v1128
        %1202 = vst [vmem:[%s350 + $0x1d0] sm:$0xff] %v1130
        %1203 = vst [vmem:[%s350 + $0x1d8] sm:$0xff] %v1132
        %1204 = vst [vmem:[%s350 + $0x1e0] sm:$0xff] %v1136
        %1205 = vst [vmem:[%s350 + $0x1e8] sm:$0xff] %v1138
        %1206 = vst [vmem:[%s350 + $0x1f0] sm:$0xff] %v1140
        %1207 = vst [vmem:[%s350 + $0x1f8] sm:$0xff] %v1142
        %s1208 = sand.u32 %s188, 1
        %s1209 = scalar_lea.sflag [#allocation4], %s1208
        %s1210 = sand.u32 %s188, 1
        %s1211 = smul.addr %s1210, 512
        %s1212 = scalar_lea.vmem [#allocation8], %s1211
        // Predicated region
        $region53: #{tpu_custom_call.1} parent=39 // pred_check
          %p1213 = pneg %p198
        $region54: #{tpu_custom_call.1} parent=39 // pred_check_branch
          %1215 = sbr.rel (%p1213) target = $region56
        $region55: #{tpu_custom_call.1} parent=39 // pred_region
          %s1216 = smul.u32 32, %s31
          %s1217 = smul.u32 2, %s32
          %s1219 = ssub.s32 8192, 8192
          %1220 = vsyncadd %s1209, %s1219
          %s1221 = smul.addr %s1216, 2
          %s1222 = sadd.s32 %s1217, %s1221
          %s1223 = smul.addr %s30, 64
          %s1224 = sadd.s32 %s1222, %s1223
          %s1225 = smul.addr %s1224, 128
          %s1226 = scalar_lea.hbm %s5, %s1225
          %s1227 = sshll.u32 %s1212, 4
          %s1228 = int_to_ptr.vmem [resolvable:$true] %s1227
          %1233 = dma.vmem_to_hbm [thread:$0]  %s1228, 8192, %s1226, %s1209, 256, 256, 16
        $region56: #{tpu_custom_call.1} parent=39 // pred_fallthru
          _
      $region40: #{tpu_custom_call.1} parent=5 // pred_fallthru
        _
      %p1234 = scmp.le.s32.totalorder 2, %s20
      // Predicated region
      $region57: #{tpu_custom_call.1} parent=5 // pred_check
        %p1235 = pneg %p1234
      $region58: #{tpu_custom_call.1} parent=5 // pred_check_branch
        %1237 = sbr.rel (%p1235) target = $region60
      $region59: #{tpu_custom_call.1} parent=5 // pred_region
        %s1238 = ssub.s32 %s20, 2
        // Predicated region
        $region61: #{tpu_custom_call.1} parent=59 // pred_check
          %p1239 = pneg %p204
        $region62: #{tpu_custom_call.1} parent=59 // pred_check_branch
          %1241 = sbr.rel (%p1239) target = $region64
        $region63: #{tpu_custom_call.1} parent=59 // pred_region
          %s1242 = sand.u32 %s189, 1
          %s1243 = scalar_lea.sflag [#allocation4], %s1242
          %s1244 = sand.u32 %s189, 1
          %s1245 = smul.addr %s1244, 512
          %s1246 = scalar_lea.vmem [#allocation8], %s1245
          %1247 = dma.done %s1243, 8192
        $region64: #{tpu_custom_call.1} parent=59 // pred_fallthru
          _
      $region60: #{tpu_custom_call.1} parent=5 // pred_fallthru
        _
    $region6: #{tpu_custom_call.1} parent=1 // loop_footer
      %s24 = sadd.s32 1, %s20
    $region7: #{tpu_custom_call.1} parent=1 // loop_footer_branch
      %19 = sbr.rel target = $region3
    $region8: #{tpu_custom_call.1} parent=1 // loop_exit
      _
    %1248 = vsyncpa [#allocation3], 1
    %s1249 = scalar_lea.sflag [#allocation3], 1
    %1250 = vsyncpa %s1249, 1
    %1251 = vsyncpa [#allocation6], 1
    %s1252 = scalar_lea.sflag [#allocation6], 1
    %1253 = vsyncpa %s1252, 1
    %1254 = vsyncpa [#allocation4], 1
    %s1255 = scalar_lea.sflag [#allocation4], 1
    %1256 = vsyncpa %s1255, 1

</llo_original>
